<compile_context>
chip_gen: v6e
topology: v6e:2x2x1
jax: 0.10.0
libtpu: 0.0.40
codegen_flags: <defaults>
</compile_context>

<pallas_src>
import functools

import jax
import jax.numpy as jnp
from jax.experimental import pallas as pl
from jax.experimental.pallas import tpu as pltpu


# ----------------------------------------------------------------------------
# VMEM budgeting (generation-aware: v7x has 64 MiB physical, v5e/v6e 128 MiB)
# ----------------------------------------------------------------------------
def _vmem_limit_bytes():
    cap = 64 << 20                      # conservative default = v7x physical VMEM
    try:
        info_fn = getattr(pltpu, "get_tpu_info", None)
        if info_fn is not None:
            cap = int(info_fn().vmem_capacity_bytes)
    except Exception:
        pass
    return int(min(cap * 3 // 4, 96 << 20))


_VMEM_LIMIT = _vmem_limit_bytes()
_TILE_BUDGET = int(_VMEM_LIMIT * 0.6)


def _pick_tm(M, per_row_elems, resident_elems=0):
    """Largest row tile (prefers 1024/512/256/...) dividing M that fits VMEM."""
    for t in (1024, 512, 256, 128, 64, 32, 16, 8):
        if M % t:
            continue
        need = 4 * (2 * t * per_row_elems + resident_elems)   # f32, double-buffered
        if need <= _TILE_BUDGET:
            return t
    return M   # full-extent fallback (single grid step)


# ----------------------------------------------------------------------------
# Pallas kernels
# ----------------------------------------------------------------------------
def _mm_stats_epilogue(y, o_ref, sum_ref, ssq_ref):
    # Per-channel batch sum / sum-of-squares accumulated in resident outputs.
    @pl.when(pl.program_id(0) == 0)
    def _():
        sum_ref[...] = jnp.zeros_like(sum_ref)
        ssq_ref[...] = jnp.zeros_like(ssq_ref)

    o_ref[...] = y
    sum_ref[...] += jnp.sum(y, axis=0, keepdims=True)
    ssq_ref[...] += jnp.sum(y * y, axis=0, keepdims=True)


def _mm_stats_kernel(x_ref, w_ref, o_ref, sum_ref, ssq_ref):
    # y = x @ w  (conv-as-matmul), BN stats fused in the epilogue.
    y = jnp.dot(x_ref[...], w_ref[...], preferred_element_type=jnp.float32)
    _mm_stats_epilogue(y, o_ref, sum_ref, ssq_ref)


def _act_mm_stats_kernel(x_ref, s_ref, h_ref, w_ref, o_ref, sum_ref, ssq_ref):
    # Fused prologue: previous layer's BatchNorm (as per-channel affine) + ReLU.
    z = jnp.maximum(x_ref[...] * s_ref[...] + h_ref[...], 0.0)
    y = jnp.dot(z, w_ref[...], preferred_element_type=jnp.float32)
    _mm_stats_epilogue(y, o_ref, sum_ref, ssq_ref)


def _conv3x3_kernel(*refs, stride, H, Ho, with_shortcut):
    # One output row (Wo, Cm) per grid step; grid = (N, Ho).
    if with_shortcut:
        (r0, r1, r2, xrow_ref, s1_ref, h1_ref, w2_ref, sel_ref, wsc_ref,
         o_ref, sum2_ref, ssq2_ref, osc_ref, sumsc_ref, ssqsc_ref) = refs
    else:
        (r0, r1, r2, s1_ref, h1_ref, w2_ref, sel_ref,
         o_ref, sum2_ref, ssq2_ref) = refs

    oh = pl.program_id(1)
    first = (pl.program_id(0) == 0) & (oh == 0)

    @pl.when(first)
    def _():
        sum2_ref[...] = jnp.zeros_like(sum2_ref)
        ssq2_ref[...] = jnp.zeros_like(ssq2_ref)
        if with_shortcut:
            sumsc_ref[...] = jnp.zeros_like(sumsc_ref)
            ssqsc_ref[...] = jnp.zeros_like(ssqsc_ref)

    Wo, Cm = o_ref.shape
    rows = (r0, r1, r2)
    s1 = s1_ref[...]
    h1 = h1_ref[...]

    acc = jnp.zeros((Wo, Cm), jnp.float32)
    for kh in range(3):
        # Static analysis of which taps can ever touch vertical zero-padding:
        #   ih = oh*stride - 1 + kh, oh in [0, Ho-1].
        lo_can_clip = (-1 + kh) < 0
        hi_can_clip = ((Ho - 1) * stride - 1 + kh) > H - 1
        if lo_can_clip and not hi_can_clip:
            valid = (oh > 0).astype(jnp.float32)
        elif hi_can_clip and not lo_can_clip:
            valid = (oh < Ho - 1).astype(jnp.float32)
        elif lo_can_clip and hi_can_clip:
            ih = oh * stride - 1 + kh
            valid = jnp.logical_and(ih >= 0, ih < H).astype(jnp.float32)
        else:
            valid = None   # tap never leaves the image -> no mask at all

        # bn1 affine + ReLU prologue applied on the fly.  When the (clamped)
        # DMA'd row is really vertical zero-padding we fold the 0/1 mask into
        # the (1, Cm) scale/shift, so relu(row*0 + 0) == 0 without touching
        # the whole (W, Cm) row.
        if valid is None:
            z = jnp.maximum(rows[kh][...] * s1 + h1, 0.0)
        else:
            z = jnp.maximum(rows[kh][...] * (s1 * valid) + (h1 * valid), 0.0)
        for kw in range(3):
            # 0/1 selection matmul = "shift by kw-1, subsample by stride,
            # zero-pad" column gather, done on the MXU (no strided VMEM access).
            cols = jnp.dot(sel_ref[kw], z, preferred_element_type=jnp.float32)
            acc = acc + jnp.dot(cols, w2_ref[kh * 3 + kw],
                                preferred_element_type=jnp.float32)

    o_ref[...] = acc
    sum2_ref[...] += jnp.sum(acc, axis=0, keepdims=True)
    ssq2_ref[...] += jnp.sum(acc * acc, axis=0, keepdims=True)

    if with_shortcut:
        # Projection shortcut (1x1, stride) fused into the same pass over x:
        # sel[1] selects columns stride*ow, i.e. exactly the strided pixels.
        xc = jnp.dot(sel_ref[1], xrow_ref[...], preferred_element_type=jnp.float32)
        ysc = jnp.dot(xc, wsc_ref[...], preferred_element_type=jnp.float32)
        osc_ref[...] = ysc
        sumsc_ref[...] += jnp.sum(ysc, axis=0, keepdims=True)
        ssqsc_ref[...] += jnp.sum(ysc * ysc, axis=0, keepdims=True)


def _dual_affine_add_relu_kernel(x_ref, sx_ref, hx_ref, i_ref, si_ref, hi_ref, o_ref):
    # relu( bn3(conv3_out) + bn_sc(shortcut_out) ), both BNs folded to affines.
    main = x_ref[...] * sx_ref[...] + hx_ref[...]
    ident = i_ref[...] * si_ref[...] + hi_ref[...]
    o_ref[...] = jnp.maximum(main + ident, 0.0)


# ----------------------------------------------------------------------------
# pallas_call wrappers
# ----------------------------------------------------------------------------
def matmul_stats(x, w, scale=None, shift=None):
    """y = [relu(x*scale+shift)] @ w plus per-channel sum / sum-of-squares of y."""
    M, K = x.shape
    Nc = w.shape[1]
    resident = K * Nc + 4 * Nc + (2 * K if scale is not None else 0)
    tm = _pick_tm(M, per_row_elems=K + Nc, resident_elems=resident)

    if scale is None:
        kernel = _mm_stats_kernel
        in_specs = [
            pl.BlockSpec((tm, K), lambda i: (i, 0)),
            pl.BlockSpec((K, Nc), lambda i: (0, 0)),
        ]
        args = (x, w)
    else:
        kernel = _act_mm_stats_kernel
        in_specs = [
            pl.BlockSpec((tm, K), lambda i: (i, 0)),
            pl.BlockSpec((1, K), lambda i: (0, 0)),
            pl.BlockSpec((1, K), lambda i: (0, 0)),
            pl.BlockSpec((K, Nc), lambda i: (0, 0)),
        ]
        args = (x, scale, shift, w)

    return pl.pallas_call(
        kernel,
        out_shape=(
            jax.ShapeDtypeStruct((M, Nc), jnp.float32),
            jax.ShapeDtypeStruct((1, Nc), jnp.float32),
            jax.ShapeDtypeStruct((1, Nc), jnp.float32),
        ),
        grid_spec=pltpu.PrefetchScalarGridSpec(
            num_scalar_prefetch=0,
            grid=(M // tm,),
            in_specs=in_specs,
            out_specs=(
                pl.BlockSpec((tm, Nc), lambda i: (i, 0)),
                pl.BlockSpec((1, Nc), lambda i: (0, 0)),
                pl.BlockSpec((1, Nc), lambda i: (0, 0)),
            ),
        ),
        # Stats outputs are revisited accumulators across the M axis, so this
        # axis must stay "arbitrary" (not megacore-parallel).
        compiler_params=pltpu.CompilerParams(
            dimension_semantics=("arbitrary",),
            vmem_limit_bytes=_VMEM_LIMIT),
    )(*args)


def conv3x3_fused(y1_4d, s1, h1, w2_taps, sel, stride, Ho, Wo, x_nhwc=None, wsc=None):
    """3x3/stride/pad=1 conv with fused bn1-affine+ReLU prologue, bn2 stats
    epilogue and (optionally) the projection-shortcut 1x1 conv + its stats."""
    N, H, W, Cm = y1_4d.shape
    with_shortcut = x_nhwc is not None

    kernel = functools.partial(_conv3x3_kernel, stride=stride, H=H, Ho=Ho,
                               with_shortcut=with_shortcut)

    def row_spec(kh):
        # One input row per tap; clamp the row index (the kernel zeroes the
        # contribution of rows that are really vertical zero-padding).
        return pl.BlockSpec(
            (None, None, W, Cm),
            lambda n, oh, kh=kh: (
                n,
                jnp.maximum(jnp.minimum(oh * stride - 1 + kh, H - 1), 0),
                0, 0))

    in_specs = [row_spec(0), row_spec(1), row_spec(2)]
    args = [y1_4d, y1_4d, y1_4d]
    if with_shortcut:
        Cin = x_nhwc.shape[-1]
        Cout = wsc.shape[-1]
        in_specs.append(pl.BlockSpec((None, None, W, Cin),
                                     lambda n, oh: (n, oh * stride, 0, 0)))
        args.append(x_nhwc)
    in_specs += [
        pl.BlockSpec((1, Cm), lambda n, oh: (0, 0)),
        pl.BlockSpec((1, Cm), lambda n, oh: (0, 0)),
        pl.BlockSpec((9, Cm, Cm), lambda n, oh: (0, 0, 0)),
        pl.BlockSpec((3, Wo, W), lambda n, oh: (0, 0, 0)),
    ]
    args += [s1, h1, w2_taps, sel]
    if with_shortcut:
        in_specs.append(pl.BlockSpec((Cin, Cout), lambda n, oh: (0, 0)))
        args.append(wsc)

    out_shape = [
        jax.ShapeDtypeStruct((N, Ho, Wo, Cm), jnp.float32),
        jax.ShapeDtypeStruct((1, Cm), jnp.float32),
        jax.ShapeDtypeStruct((1, Cm), jnp.float32),
    ]
    out_specs = [
        pl.BlockSpec((None, None, Wo, Cm), lambda n, oh: (n, oh, 0, 0)),
        pl.BlockSpec((1, Cm), lambda n, oh: (0, 0)),
        pl.BlockSpec((1, Cm), lambda n, oh: (0, 0)),
    ]
    if with_shortcut:
        out_shape += [
            jax.ShapeDtypeStruct((N, Ho, Wo, Cout), jnp.float32),
            jax.ShapeDtypeStruct((1, Cout), jnp.float32),
            jax.ShapeDtypeStruct((1, Cout), jnp.float32),
        ]
        out_specs += [
            pl.BlockSpec((None, None, Wo, Cout), lambda n, oh: (n, oh, 0, 0)),
            pl.BlockSpec((1, Cout), lambda n, oh: (0, 0)),
            pl.BlockSpec((1, Cout), lambda n, oh: (0, 0)),
        ]

    return pl.pallas_call(
        kernel,
        out_shape=tuple(out_shape),
        grid_spec=pltpu.PrefetchScalarGridSpec(
            num_scalar_prefetch=0,
            grid=(N, Ho),
            in_specs=in_specs,
            out_specs=tuple(out_specs),
        ),
        # Stats accumulators are revisited across both grid axes.
        compiler_params=pltpu.CompilerParams(
            dimension_semantics=("arbitrary", "arbitrary"),
            vmem_limit_bytes=_VMEM_LIMIT),
    )(*args)


def dual_affine_add_relu(x, sx, hx, ident, si, hi):
    M, C = x.shape
    tm = _pick_tm(M, per_row_elems=3 * C, resident_elems=4 * C)
    return pl.pallas_call(
        _dual_affine_add_relu_kernel,
        out_shape=jax.ShapeDtypeStruct((M, C), jnp.float32),
        grid_spec=pltpu.PrefetchScalarGridSpec(
            num_scalar_prefetch=0,
            grid=(M // tm,),
            in_specs=[
                pl.BlockSpec((tm, C), lambda i: (i, 0)),
                pl.BlockSpec((1, C), lambda i: (0, 0)),
                pl.BlockSpec((1, C), lambda i: (0, 0)),
                pl.BlockSpec((tm, C), lambda i: (i, 0)),
                pl.BlockSpec((1, C), lambda i: (0, 0)),
                pl.BlockSpec((1, C), lambda i: (0, 0)),
            ],
            out_specs=pl.BlockSpec((tm, C), lambda i: (i, 0)),
        ),
        compiler_params=pltpu.CompilerParams(
            dimension_semantics=("parallel",),
            vmem_limit_bytes=_VMEM_LIMIT),
    )(x, sx, hx, ident, si, hi)


# ----------------------------------------------------------------------------
# Glue (plain JAX, O(C) work): BN scale/shift from stats, selection matrices
# ----------------------------------------------------------------------------
def _bn_from_stats(ssum, ssq, count, gamma, beta, eps=1e-5):
    mean = ssum / count
    # Clamp: E[x^2] - E[x]^2 can go slightly negative from rounding.
    var = jnp.maximum(ssq / count - mean * mean, 0.0)
    scale = gamma.reshape(1, -1) * jax.lax.rsqrt(var + eps)
    shift = beta.reshape(1, -1) - mean * scale
    return scale, shift


def _make_col_select(W, Wo, stride):
    # sel[kw, ow, c] = 1 iff c == (kw - 1) + stride * ow (out-of-range columns
    # simply have no match, which implements the zero padding).
    ow = jnp.arange(Wo)[:, None]
    c = jnp.arange(W)[None, :]
    return jnp.stack(
        [(c == (kw - 1 + stride * ow)).astype(jnp.float32) for kw in range(3)],
        axis=0)


# ----------------------------------------------------------------------------
# Bottleneck forward (Pallas) and parameter init
# ----------------------------------------------------------------------------
def init_bottleneck_params(key, in_ch, out_ch, stride, expansion=4):
    ks = jax.random.split(key, 16)
    cout = out_ch * expansion

    def conv_init(k, co, ci, kh, kw):
        fan_in = ci * kh * kw
        return jax.random.normal(k, (co, ci, kh, kw), jnp.float32) / jnp.sqrt(fan_in)

    def vec_init(k, c, scale=0.1):
        return scale * jax.random.normal(k, (c,), jnp.float32)

    p = dict(
        w1=conv_init(ks[0], out_ch, in_ch, 1, 1), b1=vec_init(ks[1], out_ch),
        g1=1.0 + vec_init(ks[2], out_ch), be1=vec_init(ks[3], out_ch),
        w2=conv_init(ks[4], out_ch, out_ch, 3, 3), b2=vec_init(ks[5], out_ch),
        g2=1.0 + vec_init(ks[6], out_ch), be2=vec_init(ks[7], out_ch),
        w3=conv_init(ks[8], cout, out_ch, 1, 1), b3=vec_init(ks[9], cout),
        g3=1.0 + vec_init(ks[10], cout), be3=vec_init(ks[11], cout),
    )
    if stride != 1 or in_ch != cout:
        p.update(
            wsc=conv_init(ks[12], cout, in_ch, 1, 1), bsc=vec_init(ks[13], cout),
            gsc=1.0 + vec_init(ks[14], cout), besc=vec_init(ks[15], cout),
        )
    return p


def bottleneck_forward(x_nchw, p, stride):
    eps = 1e-5
    x = jnp.transpose(x_nchw, (0, 2, 3, 1)).astype(jnp.float32)  # NHWC
    N, H, W, Cin = x.shape
    Cm = p["w1"].shape[0]
    Cout = p["w3"].shape[0]
    Ho = (H + 2 - 3) // stride + 1
    Wo = (W + 2 - 3) // stride + 1
    M1 = N * H * W
    M2 = N * Ho * Wo

    # conv biases are dropped: training-mode BN subtracts the batch mean, so
    # the bias cancels exactly; it is folded away instead of being computed.

    # --- conv1 (1x1) + bn1 batch stats fused in the matmul epilogue ---------
    w1 = p["w1"].reshape(Cm, Cin).T
    y1, sum1, ssq1 = matmul_stats(x.reshape(M1, Cin), w1)
    s1, h1 = _bn_from_stats(sum1, ssq1, M1, p["g1"], p["be1"], eps)

    # --- conv2 (3x3/stride/pad=1): bn1 affine+ReLU prologue, 9-tap matmul
    #     accumulation (no HBM im2col), bn2 stats epilogue, and the
    #     projection shortcut fused into the same pass over x ----------------
    w2_taps = jnp.transpose(p["w2"], (2, 3, 1, 0)).reshape(9, Cm, Cm)  # (tap,ci,co)
    sel = _make_col_select(W, Wo, stride)
    y1_4d = y1.reshape(N, H, W, Cm)

    if "wsc" in p:
        wsc = p["wsc"].reshape(Cout, Cin).T
        (y2_4d, sum2, ssq2, ysc_4d, sumsc, ssqsc) = conv3x3_fused(
            y1_4d, s1, h1, w2_taps, sel, stride, Ho, Wo, x_nhwc=x, wsc=wsc)
        ysc = ysc_4d.reshape(M2, Cout)
        ssc, hsc = _bn_from_stats(sumsc, ssqsc, M2, p["gsc"], p["besc"], eps)
    else:
        y2_4d, sum2, ssq2 = conv3x3_fused(
            y1_4d, s1, h1, w2_taps, sel, stride, Ho, Wo)
        ysc = x.reshape(M1, Cin)          # identity shortcut (stride==1, Cin==Cout)
        ssc = jnp.ones((1, Cout), jnp.float32)
        hsc = jnp.zeros((1, Cout), jnp.float32)
    s2, h2 = _bn_from_stats(sum2, ssq2, M2, p["g2"], p["be2"], eps)

    # --- conv3 (1x1): bn2 affine+ReLU prologue + bn3 stats epilogue ---------
    w3 = p["w3"].reshape(Cout, Cm).T
    y3, sum3, ssq3 = matmul_stats(y2_4d.reshape(M2, Cm), w3, scale=s2, shift=h2)
    s3, h3 = _bn_from_stats(sum3, ssq3, M2, p["g3"], p["be3"], eps)

    # --- relu( bn3(main) + bn_sc(shortcut) ), one fused elementwise pass ----
    out = dual_affine_add_relu(y3, s3, h3, ysc, ssc, hsc)
    return jnp.transpose(out.reshape(N, Ho, Wo, Cout), (0, 3, 1, 2))  # NCHW


# ----------------------------------------------------------------------------
# Pure-JAX reference (sanity check only; keeps the conv biases)
# ----------------------------------------------------------------------------
def reference_forward(x, p, stride):
    eps = 1e-5

    def conv(t, w, b, s, pad):
        y = jax.lax.conv_general_dilated(
            t, w, window_strides=(s, s), padding=[(pad, pad), (pad, pad)],
            dimension_numbers=("NCHW", "OIHW", "NCHW"),
            precision=jax.lax.Precision.HIGHEST)
        return y + b[None, :, None, None]

    def bn(t, g, b):
        m = t.mean(axis=(0, 2, 3), keepdims=True)
        v = ((t - m) ** 2).mean(axis=(0, 2, 3), keepdims=True)
        return (t - m) / jnp.sqrt(v + eps) * g[None, :, None, None] + b[None, :, None, None]

    relu = lambda t: jnp.maximum(t, 0.0)
    ident = bn(conv(x, p["wsc"], p["bsc"], stride, 0), p["gsc"], p["besc"]) if "wsc" in p else x
    h = relu(bn(conv(x, p["w1"], p["b1"], 1, 0), p["g1"], p["be1"]))
    h = relu(bn(conv(h, p["w2"], p["b2"], stride, 1), p["g2"], p["be2"]))
    h = bn(conv(h, p["w3"], p["b3"], 1, 0), p["g3"], p["be3"])
    return relu(h + ident)


# ----------------------------------------------------------------------------
if __name__ == "__main__":
    key = jax.random.PRNGKey(0)
    N, in_ch, H, W = 2, 4, 16, 16
    out_ch, stride = 4, 2  # projection shortcut is active (stride!=1, 4 != 16)

    kx, kp = jax.random.split(key)
    x = jax.random.normal(kx, (N, in_ch, H, W), jnp.float32)
    params = init_bottleneck_params(kp, in_ch, out_ch, stride)

    y = bottleneck_forward(x, params, stride)
    y = jax.block_until_ready(y)

    assert y.shape == (N, out_ch * 4, H // stride, W // stride), y.shape
    y_ref = reference_forward(x, params, stride)
    err = float(jnp.max(jnp.abs(y - y_ref)))
    if not bool(jnp.all(jnp.isfinite(y))) or err > 5e-2:
        raise AssertionError(f"Pallas output mismatch vs reference: max abs err {err}")

    print("KERNEL_OK")
</pallas_src>

<mosaic_0001>
module attributes {stable_mosaic.version = 11 : i64} {
  func.func @_mm_stats_kernel(%arg0: i32, %arg1: memref<512x4xf32, #tpu.memory_space<vmem>>, %arg2: memref<4x4xf32, #tpu.memory_space<vmem>>, %arg3: memref<512x4xf32, #tpu.memory_space<vmem>>, %arg4: memref<1x4xf32, #tpu.memory_space<vmem>>, %arg5: memref<1x4xf32, #tpu.memory_space<vmem>>) attributes {dimension_semantics = [#tpu.dimension_semantics<arbitrary>], iteration_bounds = array<i64: 1>, scalar_prefetch = 0 : i64, scratch_operands = 0 : i64, tpu.core_type = #tpu.core_type<tc>, window_params = [{transform_indices = @transform_0, window_bounds = array<i64: 512, 4>}, {pipeline_mode = #tpu.pipeline_mode<synchronous>, transform_indices = @transform_1, window_bounds = array<i64: 4, 4>}, {transform_indices = @transform_2, window_bounds = array<i64: 512, 4>}, {pipeline_mode = #tpu.pipeline_mode<synchronous>, transform_indices = @transform_3, window_bounds = array<i64: 1, 4>}, {pipeline_mode = #tpu.pipeline_mode<synchronous>, transform_indices = @transform_4, window_bounds = array<i64: 1, 4>}]} {
    %c0 = arith.constant 0 : index
    %c0_0 = arith.constant 0 : index
    %0 = vector.load %arg1[%c0, %c0_0] : memref<512x4xf32, #tpu.memory_space<vmem>>, vector<512x4xf32>
    %c0_1 = arith.constant 0 : index
    %c0_2 = arith.constant 0 : index
    %1 = vector.load %arg2[%c0_1, %c0_2] : memref<4x4xf32, #tpu.memory_space<vmem>>, vector<4x4xf32>
    %cst = arith.constant dense<0.000000e+00> : vector<512x4xf32>
    %2 = tpu.matmul %0, %1, %cst {dimension_numbers = #tpu.dot_dimension_numbers<[1], [0], [0], [1], [0, 0, 1, 1], [], []>} : vector<512x4xf32>, vector<4x4xf32>, vector<512x4xf32> -> vector<512x4xf32>
    %c0_i32 = arith.constant 0 : i32
    %3 = arith.cmpi eq, %arg0, %c0_i32 : i32
    %4 = arith.extui %3 : i1 to i32
    %c0_i32_3 = arith.constant 0 : i32
    %5 = arith.cmpi ne, %4, %c0_i32_3 : i32
    scf.if %5 {
      %cst_16 = arith.constant 0.000000e+00 : f32
      %18 = vector.broadcast %cst_16 : f32 to vector<1x4xf32>
      %c0_17 = arith.constant 0 : index
      %c0_18 = arith.constant 0 : index
      %19 = vector.load %arg4[%c0_17, %c0_18] : memref<1x4xf32, #tpu.memory_space<vmem>>, vector<1x4xf32>
      tpu.vector_store %arg4[%c0_17, %c0_18], %18 {strides = array<i32>} : memref<1x4xf32, #tpu.memory_space<vmem>>, vector<1x4xf32>,
      %cst_19 = arith.constant 0.000000e+00 : f32
      %20 = vector.broadcast %cst_19 : f32 to vector<1x4xf32>
      %c0_20 = arith.constant 0 : index
      %c0_21 = arith.constant 0 : index
      %21 = vector.load %arg5[%c0_20, %c0_21] : memref<1x4xf32, #tpu.memory_space<vmem>>, vector<1x4xf32>
      tpu.vector_store %arg5[%c0_20, %c0_21], %20 {strides = array<i32>} : memref<1x4xf32, #tpu.memory_space<vmem>>, vector<1x4xf32>,
    } else {
    }
    %c0_4 = arith.constant 0 : index
    %c0_5 = arith.constant 0 : index
    %6 = vector.load %arg3[%c0_4, %c0_5] : memref<512x4xf32, #tpu.memory_space<vmem>>, vector<512x4xf32>
    tpu.vector_store %arg3[%c0_4, %c0_5], %2 {strides = array<i32>} : memref<512x4xf32, #tpu.memory_space<vmem>>, vector<512x4xf32>,
    %c0_6 = arith.constant 0 : index
    %c0_7 = arith.constant 0 : index
    %7 = vector.load %arg4[%c0_6, %c0_7] : memref<1x4xf32, #tpu.memory_space<vmem>>, vector<1x4xf32>
    %cst_8 = arith.constant dense<0.000000e+00> : vector<4xf32>
    %8 = vector.multi_reduction <add>, %2, %cst_8 [0] : vector<512x4xf32> to vector<4xf32>
    %9 = vector.shape_cast %8 : vector<4xf32> to vector<1x4xf32>
    %10 = arith.addf %7, %9 : vector<1x4xf32>
    %c0_9 = arith.constant 0 : index
    %c0_10 = arith.constant 0 : index
    %11 = vector.load %arg4[%c0_9, %c0_10] : memref<1x4xf32, #tpu.memory_space<vmem>>, vector<1x4xf32>
    tpu.vector_store %arg4[%c0_9, %c0_10], %10 {strides = array<i32>} : memref<1x4xf32, #tpu.memory_space<vmem>>, vector<1x4xf32>,
    %c0_11 = arith.constant 0 : index
    %c0_12 = arith.constant 0 : index
    %12 = vector.load %arg5[%c0_11, %c0_12] : memref<1x4xf32, #tpu.memory_space<vmem>>, vector<1x4xf32>
    %13 = arith.mulf %2, %2 : vector<512x4xf32>
    %cst_13 = arith.constant dense<0.000000e+00> : vector<4xf32>
    %14 = vector.multi_reduction <add>, %13, %cst_13 [0] : vector<512x4xf32> to vector<4xf32>
    %15 = vector.shape_cast %14 : vector<4xf32> to vector<1x4xf32>
    %16 = arith.addf %12, %15 : vector<1x4xf32>
    %c0_14 = arith.constant 0 : index
    %c0_15 = arith.constant 0 : index
    %17 = vector.load %arg5[%c0_14, %c0_15] : memref<1x4xf32, #tpu.memory_space<vmem>>, vector<1x4xf32>
    tpu.vector_store %arg5[%c0_14, %c0_15], %16 {strides = array<i32>} : memref<1x4xf32, #tpu.memory_space<vmem>>, vector<1x4xf32>,
    return
  }
  func.func @transform_0(%arg0: i32) -> (i32, i32) {
    %c0_i32 = arith.constant 0 : i32
    %c0_i32_0 = arith.constant 0 : i32
    return %arg0, %c0_i32 : i32, i32
  }
  func.func @transform_1(%arg0: i32) -> (i32, i32) {
    %c0_i32 = arith.constant 0 : i32
    %c0_i32_0 = arith.constant 0 : i32
    %c0_i32_1 = arith.constant 0 : i32
    return %c0_i32, %c0_i32_0 : i32, i32
  }
  func.func @transform_2(%arg0: i32) -> (i32, i32) {
    %c0_i32 = arith.constant 0 : i32
    %c0_i32_0 = arith.constant 0 : i32
    return %arg0, %c0_i32 : i32, i32
  }
  func.func @transform_3(%arg0: i32) -> (i32, i32) {
    %c0_i32 = arith.constant 0 : i32
    %c0_i32_0 = arith.constant 0 : i32
    %c0_i32_1 = arith.constant 0 : i32
    return %c0_i32, %c0_i32_0 : i32, i32
  }
  func.func @transform_4(%arg0: i32) -> (i32, i32) {
    %c0_i32 = arith.constant 0 : i32
    %c0_i32_0 = arith.constant 0 : i32
    %c0_i32_1 = arith.constant 0 : i32
    return %c0_i32, %c0_i32_0 : i32, i32
  }
}

</mosaic_0001>

<llo_original>
// kernel: tpu_custom_call.1
$region0: #{tpu_custom_call.1}
  #allocation0 [shape = 'u32[]', space=smem, size = 0x4, offset = 0x4, fixed_abs, tag = 'smem constant byte address 0x4 - core index']
  #allocation1 [shape = 'u32[144,128]{1,0:T(1,128)}', space=vmem, size = 0x12000, scoped, tag = 'internal scratch']
  %s0 = inlined_call_operand.vmem [shape: f32[512,4], index: 0, kind: input, shape index: {}]
  %s1 = inlined_call_operand.vmem [shape: f32[4,4], index: 1, kind: input, shape index: {}]
  %s2 = inlined_call_operand.vmem [shape: f32[512,4], index: 2, kind: output, shape index: {0}]
  %s3 = inlined_call_operand.hbm [shape: f32[1,4], index: 3, kind: output, shape index: {1}]
  %s4 = inlined_call_operand.hbm [shape: f32[1,4], index: 4, kind: output, shape index: {2}]
  %5 = xla_tuple %s2, %s3, %s4
  %s6 = sld [smem:[#allocation0]]
  $region38: #{tpu_custom_call.1} parent=0
    _
  %s8 = ssub.s32 1, %s6
  %s9 = scalar_select 0, %s8, %s6
  $region1: #{tpu_custom_call.1} parent=0
    #allocation2 [shape = 'u8[512]{0}', space=vmem, size = 0x400, scoped, tag = 'output window, operand 1, single buffered']
    #allocation3 [shape = 's32[1]{0}', space=sflag, size = 0x4, scoped, tag = 'scoped memory for tpu_custom_call.1']
    #allocation4 [shape = 'u8[512]{0}', space=vmem, size = 0x400, scoped, tag = 'output window, operand 2, single buffered']
    #allocation5 [shape = 's32[1]{0}', space=sflag, size = 0x4, scoped, tag = 'scoped memory for tpu_custom_call.1']
    %10 = vsyncpa [#allocation3], 0
    %11 = vsyncpa [#allocation5], 0
    // Predicated region
    $region2: #{tpu_custom_call.1} parent=1 // pred_check
      _
    $region3: #{tpu_custom_call.1} parent=1 // pred_check_branch
      %13 = sbr.rel (0) target = $region5
    $region4: #{tpu_custom_call.1} parent=1 // pred_region
      _
    $region5: #{tpu_custom_call.1} parent=1 // pred_fallthru
      _
    // Predicated region
    $region6: #{tpu_custom_call.1} parent=1 // pred_check
      _
    $region7: #{tpu_custom_call.1} parent=1 // pred_check_branch
      %15 = sbr.rel (0) target = $region9
    $region8: #{tpu_custom_call.1} parent=1 // pred_region
      _
    $region9: #{tpu_custom_call.1} parent=1 // pred_fallthru
      _
    %v16 = vld [vmem:[%s0] sm:$0xff]
    %v17 = vld [vmem:[%s0 + $0x8] sm:$0xff]
    %v18 = vld [vmem:[%s0 + $0x10] sm:$0xff]
    %v19 = vld [vmem:[%s0 + $0x18] sm:$0xff]
    %v20 = vld [vmem:[%s0 + $0x20] sm:$0xff]
    %v21 = vld [vmem:[%s0 + $0x28] sm:$0xff]
    %v22 = vld [vmem:[%s0 + $0x30] sm:$0xff]
    %v23 = vld [vmem:[%s0 + $0x38] sm:$0xff]
    %v24 = vld [vmem:[%s0 + $0x40] sm:$0xff]
    %v25 = vld [vmem:[%s0 + $0x48] sm:$0xff]
    %v26 = vld [vmem:[%s0 + $0x50] sm:$0xff]
    %v27 = vld [vmem:[%s0 + $0x58] sm:$0xff]
    %v28 = vld [vmem:[%s0 + $0x60] sm:$0xff]
    %v29 = vld [vmem:[%s0 + $0x68] sm:$0xff]
    %v30 = vld [vmem:[%s0 + $0x70] sm:$0xff]
    %v31 = vld [vmem:[%s0 + $0x78] sm:$0xff]
    %v32 = vld [vmem:[%s0 + $0x80] sm:$0xff]
    %v33 = vld [vmem:[%s0 + $0x88] sm:$0xff]
    %v34 = vld [vmem:[%s0 + $0x90] sm:$0xff]
    %v35 = vld [vmem:[%s0 + $0x98] sm:$0xff]
    %v36 = vld [vmem:[%s0 + $0xa0] sm:$0xff]
    %v37 = vld [vmem:[%s0 + $0xa8] sm:$0xff]
    %v38 = vld [vmem:[%s0 + $0xb0] sm:$0xff]
    %v39 = vld [vmem:[%s0 + $0xb8] sm:$0xff]
    %v40 = vld [vmem:[%s0 + $0xc0] sm:$0xff]
    %v41 = vld [vmem:[%s0 + $0xc8] sm:$0xff]
    %v42 = vld [vmem:[%s0 + $0xd0] sm:$0xff]
    %v43 = vld [vmem:[%s0 + $0xd8] sm:$0xff]
    %v44 = vld [vmem:[%s0 + $0xe0] sm:$0xff]
    %v45 = vld [vmem:[%s0 + $0xe8] sm:$0xff]
    %v46 = vld [vmem:[%s0 + $0xf0] sm:$0xff]
    %v47 = vld [vmem:[%s0 + $0xf8] sm:$0xff]
    %v48 = vld [vmem:[%s0 + $0x100] sm:$0xff]
    %v49 = vld [vmem:[%s0 + $0x108] sm:$0xff]
    %v50 = vld [vmem:[%s0 + $0x110] sm:$0xff]
    %v51 = vld [vmem:[%s0 + $0x118] sm:$0xff]
    %v52 = vld [vmem:[%s0 + $0x120] sm:$0xff]
    %v53 = vld [vmem:[%s0 + $0x128] sm:$0xff]
    %v54 = vld [vmem:[%s0 + $0x130] sm:$0xff]
    %v55 = vld [vmem:[%s0 + $0x138] sm:$0xff]
    %v56 = vld [vmem:[%s0 + $0x140] sm:$0xff]
    %v57 = vld [vmem:[%s0 + $0x148] sm:$0xff]
    %v58 = vld [vmem:[%s0 + $0x150] sm:$0xff]
    %v59 = vld [vmem:[%s0 + $0x158] sm:$0xff]
    %v60 = vld [vmem:[%s0 + $0x160] sm:$0xff]
    %v61 = vld [vmem:[%s0 + $0x168] sm:$0xff]
    %v62 = vld [vmem:[%s0 + $0x170] sm:$0xff]
    %v63 = vld [vmem:[%s0 + $0x178] sm:$0xff]
    %v64 = vld [vmem:[%s0 + $0x180] sm:$0xff]
    %v65 = vld [vmem:[%s0 + $0x188] sm:$0xff]
    %v66 = vld [vmem:[%s0 + $0x190] sm:$0xff]
    %v67 = vld [vmem:[%s0 + $0x198] sm:$0xff]
    %v68 = vld [vmem:[%s0 + $0x1a0] sm:$0xff]
    %v69 = vld [vmem:[%s0 + $0x1a8] sm:$0xff]
    %v70 = vld [vmem:[%s0 + $0x1b0] sm:$0xff]
    %v71 = vld [vmem:[%s0 + $0x1b8] sm:$0xff]
    %v72 = vld [vmem:[%s0 + $0x1c0] sm:$0xff]
    %v73 = vld [vmem:[%s0 + $0x1c8] sm:$0xff]
    %v74 = vld [vmem:[%s0 + $0x1d0] sm:$0xff]
    %v75 = vld [vmem:[%s0 + $0x1d8] sm:$0xff]
    %v76 = vld [vmem:[%s0 + $0x1e0] sm:$0xff]
    %v77 = vld [vmem:[%s0 + $0x1e8] sm:$0xff]
    %v78 = vld [vmem:[%s0 + $0x1f0] sm:$0xff]
    %v79 = vld [vmem:[%s0 + $0x1f8] sm:$0xff]
    %v80 = vld [vmem:[%s1] sm:$0xf]
    %vm81 = vcmask 31744
    %v83 = vsel %vm81, %v16, 0
    %v86 = vsel %vm81, %v17, 0
    %v89 = vsel %vm81, %v18, 0
    %v92 = vsel %vm81, %v19, 0
    %v95 = vsel %vm81, %v20, 0
    %v98 = vsel %vm81, %v21, 0
    %v101 = vsel %vm81, %v22, 0
    %v104 = vsel %vm81, %v23, 0
    %v107 = vsel %vm81, %v24, 0
    %v110 = vsel %vm81, %v25, 0
    %v113 = vsel %vm81, %v26, 0
    %v116 = vsel %vm81, %v27, 0
    %v119 = vsel %vm81, %v28, 0
    %v122 = vsel %vm81, %v29, 0
    %v125 = vsel %vm81, %v30, 0
    %v128 = vsel %vm81, %v31, 0
    %v131 = vsel %vm81, %v32, 0
    %v134 = vsel %vm81, %v33, 0
    %v137 = vsel %vm81, %v34, 0
    %v140 = vsel %vm81, %v35, 0
    %v143 = vsel %vm81, %v36, 0
    %v146 = vsel %vm81, %v37, 0
    %v149 = vsel %vm81, %v38, 0
    %v152 = vsel %vm81, %v39, 0
    %v155 = vsel %vm81, %v40, 0
    %v158 = vsel %vm81, %v41, 0
    %v161 = vsel %vm81, %v42, 0
    %v164 = vsel %vm81, %v43, 0
    %v167 = vsel %vm81, %v44, 0
    %v170 = vsel %vm81, %v45, 0
    %v173 = vsel %vm81, %v46, 0
    %v176 = vsel %vm81, %v47, 0
    %v179 = vsel %vm81, %v48, 0
    %v182 = vsel %vm81, %v49, 0
    %v185 = vsel %vm81, %v50, 0
    %v188 = vsel %vm81, %v51, 0
    %v191 = vsel %vm81, %v52, 0
    %v194 = vsel %vm81, %v53, 0
    %v197 = vsel %vm81, %v54, 0
    %v200 = vsel %vm81, %v55, 0
    %v203 = vsel %vm81, %v56, 0
    %v206 = vsel %vm81, %v57, 0
    %v209 = vsel %vm81, %v58, 0
    %v212 = vsel %vm81, %v59, 0
    %v215 = vsel %vm81, %v60, 0
    %v218 = vsel %vm81, %v61, 0
    %v221 = vsel %vm81, %v62, 0
    %v224 = vsel %vm81, %v63, 0
    %v227 = vsel %vm81, %v64, 0
    %v230 = vsel %vm81, %v65, 0
    %v233 = vsel %vm81, %v66, 0
    %v236 = vsel %vm81, %v67, 0
    %v239 = vsel %vm81, %v68, 0
    %v242 = vsel %vm81, %v69, 0
    %v245 = vsel %vm81, %v70, 0
    %v248 = vsel %vm81, %v71, 0
    %v251 = vsel %vm81, %v72, 0
    %v254 = vsel %vm81, %v73, 0
    %v257 = vsel %vm81, %v74, 0
    %v260 = vsel %vm81, %v75, 0
    %v263 = vsel %vm81, %v76, 0
    %v266 = vsel %vm81, %v77, 0
    %v269 = vsel %vm81, %v78, 0
    %v272 = vsel %vm81, %v79, 0
    %vm274 = vcmask 1043456
    %v276 = vsel %vm274, %v80, 0
    %278 = vmatprep.subr.mxu0 0.0
    %279 = vmatpush1.msra.mxu0 0.0
    %280 = vmatprep.subr.mxu0 0.0
    %281 = vmatpush1.msra.mxu0 0.0
    %282 = vmatprep.subr.mxu0 0.0
    %283 = vmatpush1.msra.mxu0 0.0
    %284 = vmatprep.subr.mxu0 0.0
    %285 = vmatpush1.msra.mxu0 0.0
    %286 = vmatprep.subr.mxu0 0.0
    %287 = vmatpush1.msra.mxu0 0.0
    %288 = vmatprep.subr.mxu0 0.0
    %289 = vmatpush1.msra.mxu0 0.0
    %290 = vmatprep.subr.mxu0 0.0
    %291 = vmatpush1.msra.mxu0 0.0
    %292 = vmatprep.subr.mxu0 0.0
    %293 = vmatpush1.msra.mxu0 0.0
    %294 = vmatprep.subr.mxu0 0.0
    %295 = vmatpush1.msra.mxu0 0.0
    %296 = vmatprep.subr.mxu0 0.0
    %297 = vmatpush1.msra.mxu0 0.0
    %298 = vmatprep.subr.mxu0 0.0
    %299 = vmatpush1.msra.mxu0 0.0
    %300 = vmatprep.subr.mxu0 0.0
    %301 = vmatpush1.msra.mxu0 0.0
    %302 = vmatprep.subr.mxu0 0.0
    %303 = vmatpush1.msra.mxu0 0.0
    %304 = vmatprep.subr.mxu0 0.0
    %305 = vmatpush1.msra.mxu0 0.0
    %306 = vmatprep.subr.mxu0 0.0
    %307 = vmatpush1.msra.mxu0 0.0
    %308 = vmatprep.subr.mxu0 0.0
    %309 = vmatpush1.msra.mxu0 %v276
    %310 = vmatprep.subr.mxu0 0.0
    %311 = vmatpush2.msra.mxu0 0.0
    %312 = vmatprep.subr.mxu0 0.0
    %313 = vmatpush2.msra.mxu0 0.0
    %314 = vmatprep.subr.mxu0 0.0
    %315 = vmatpush2.msra.mxu0 0.0
    %316 = vmatprep.subr.mxu0 0.0
    %317 = vmatpush2.msra.mxu0 0.0
    %318 = vmatprep.subr.mxu0 0.0
    %319 = vmatpush2.msra.mxu0 0.0
    %320 = vmatprep.subr.mxu0 0.0
    %321 = vmatpush2.msra.mxu0 0.0
    %322 = vmatprep.subr.mxu0 0.0
    %323 = vmatpush2.msra.mxu0 0.0
    %324 = vmatprep.subr.mxu0 0.0
    %325 = vmatpush2.msra.mxu0 0.0
    %326 = vmatprep.subr.mxu0 0.0
    %327 = vmatpush2.msra.mxu0 0.0
    %328 = vmatprep.subr.mxu0 0.0
    %329 = vmatpush2.msra.mxu0 0.0
    %330 = vmatprep.subr.mxu0 0.0
    %331 = vmatpush2.msra.mxu0 0.0
    %332 = vmatprep.subr.mxu0 0.0
    %333 = vmatpush2.msra.mxu0 0.0
    %334 = vmatprep.subr.mxu0 0.0
    %335 = vmatpush2.msra.mxu0 0.0
    %336 = vmatprep.subr.mxu0 0.0
    %337 = vmatpush2.msra.mxu0 0.0
    %338 = vmatprep.subr.mxu0 0.0
    %339 = vmatpush2.msra.mxu0 0.0
    %340 = vmatprep.subr.mxu0 0.0
    %341 = vmatpush2.msra.mxu0 0.0
    %342 = vmatprep.mubr.f32.mxu0 0.0
    %343 = vmatmul.mubr.f32.gmra.mxu0 %v83
    %v344 = vpop.f32.mrf.mxu0
    %v345 = vadd.f32 0.0, %v344
    %v346 = vpop.f32.mrf.mxu0
    %347 = vmatprep.mubr.f32.mxu0 0.0
    %348 = vmatmul.mubr.f32.gmra.mxu0 %v86
    %v349 = vpop.f32.mrf.mxu0
    %v350 = vadd.f32 0.0, %v349
    %v351 = vpop.f32.mrf.mxu0
    %352 = vmatprep.mubr.f32.mxu0 0.0
    %353 = vmatmul.mubr.f32.gmra.mxu0 %v89
    %v354 = vpop.f32.mrf.mxu0
    %v355 = vadd.f32 0.0, %v354
    %v356 = vpop.f32.mrf.mxu0
    %357 = vmatprep.mubr.f32.mxu0 0.0
    %358 = vmatmul.mubr.f32.gmra.mxu0 %v92
    %v359 = vpop.f32.mrf.mxu0
    %v360 = vadd.f32 0.0, %v359
    %v361 = vpop.f32.mrf.mxu0
    %362 = vmatprep.mubr.f32.mxu0 0.0
    %363 = vmatmul.mubr.f32.gmra.mxu0 %v95
    %v364 = vpop.f32.mrf.mxu0
    %v365 = vadd.f32 0.0, %v364
    %v366 = vpop.f32.mrf.mxu0
    %367 = vmatprep.mubr.f32.mxu0 0.0
    %368 = vmatmul.mubr.f32.gmra.mxu0 %v98
    %v369 = vpop.f32.mrf.mxu0
    %v370 = vadd.f32 0.0, %v369
    %v371 = vpop.f32.mrf.mxu0
    %372 = vmatprep.mubr.f32.mxu0 0.0
    %373 = vmatmul.mubr.f32.gmra.mxu0 %v101
    %v374 = vpop.f32.mrf.mxu0
    %v375 = vadd.f32 0.0, %v374
    %v376 = vpop.f32.mrf.mxu0
    %377 = vmatprep.mubr.f32.mxu0 0.0
    %378 = vmatmul.mubr.f32.gmra.mxu0 %v104
    %v379 = vpop.f32.mrf.mxu0
    %v380 = vadd.f32 0.0, %v379
    %v381 = vpop.f32.mrf.mxu0
    %382 = vmatprep.mubr.f32.mxu0 0.0
    %383 = vmatmul.mubr.f32.gmra.mxu0 %v107
    %v384 = vpop.f32.mrf.mxu0
    %v385 = vadd.f32 0.0, %v384
    %v386 = vpop.f32.mrf.mxu0
    %387 = vmatprep.mubr.f32.mxu0 0.0
    %388 = vmatmul.mubr.f32.gmra.mxu0 %v110
    %v389 = vpop.f32.mrf.mxu0
    %v390 = vadd.f32 0.0, %v389
    %v391 = vpop.f32.mrf.mxu0
    %392 = vmatprep.mubr.f32.mxu0 0.0
    %393 = vmatmul.mubr.f32.gmra.mxu0 %v113
    %v394 = vpop.f32.mrf.mxu0
    %v395 = vadd.f32 0.0, %v394
    %v396 = vpop.f32.mrf.mxu0
    %397 = vmatprep.mubr.f32.mxu0 0.0
    %398 = vmatmul.mubr.f32.gmra.mxu0 %v116
    %v399 = vpop.f32.mrf.mxu0
    %v400 = vadd.f32 0.0, %v399
    %v401 = vpop.f32.mrf.mxu0
    %402 = vmatprep.mubr.f32.mxu0 0.0
    %403 = vmatmul.mubr.f32.gmra.mxu0 %v119
    %v404 = vpop.f32.mrf.mxu0
    %v405 = vadd.f32 0.0, %v404
    %v406 = vpop.f32.mrf.mxu0
    %407 = vmatprep.mubr.f32.mxu0 0.0
    %408 = vmatmul.mubr.f32.gmra.mxu0 %v122
    %v409 = vpop.f32.mrf.mxu0
    %v410 = vadd.f32 0.0, %v409
    %v411 = vpop.f32.mrf.mxu0
    %412 = vmatprep.mubr.f32.mxu0 0.0
    %413 = vmatmul.mubr.f32.gmra.mxu0 %v125
    %v414 = vpop.f32.mrf.mxu0
    %v415 = vadd.f32 0.0, %v414
    %v416 = vpop.f32.mrf.mxu0
    %417 = vmatprep.mubr.f32.mxu0 0.0
    %418 = vmatmul.mubr.f32.gmra.mxu0 %v128
    %v419 = vpop.f32.mrf.mxu0
    %v420 = vadd.f32 0.0, %v419
    %v421 = vpop.f32.mrf.mxu0
    %422 = vmatprep.mubr.f32.mxu0 0.0
    %423 = vmatmul.mubr.f32.gmra.mxu0 %v131
    %v424 = vpop.f32.mrf.mxu0
    %v425 = vadd.f32 0.0, %v424
    %v426 = vpop.f32.mrf.mxu0
    %427 = vmatprep.mubr.f32.mxu0 0.0
    %428 = vmatmul.mubr.f32.gmra.mxu0 %v134
    %v429 = vpop.f32.mrf.mxu0
    %v430 = vadd.f32 0.0, %v429
    %v431 = vpop.f32.mrf.mxu0
    %432 = vmatprep.mubr.f32.mxu0 0.0
    %433 = vmatmul.mubr.f32.gmra.mxu0 %v137
    %v434 = vpop.f32.mrf.mxu0
    %v435 = vadd.f32 0.0, %v434
    %v436 = vpop.f32.mrf.mxu0
    %437 = vmatprep.mubr.f32.mxu0 0.0
    %438 = vmatmul.mubr.f32.gmra.mxu0 %v140
    %v439 = vpop.f32.mrf.mxu0
    %v440 = vadd.f32 0.0, %v439
    %v441 = vpop.f32.mrf.mxu0
    %442 = vmatprep.mubr.f32.mxu0 0.0
    %443 = vmatmul.mubr.f32.gmra.mxu0 %v143
    %v444 = vpop.f32.mrf.mxu0
    %v445 = vadd.f32 0.0, %v444
    %v446 = vpop.f32.mrf.mxu0
    %447 = vmatprep.mubr.f32.mxu0 0.0
    %448 = vmatmul.mubr.f32.gmra.mxu0 %v146
    %v449 = vpop.f32.mrf.mxu0
    %v450 = vadd.f32 0.0, %v449
    %v451 = vpop.f32.mrf.mxu0
    %452 = vmatprep.mubr.f32.mxu0 0.0
    %453 = vmatmul.mubr.f32.gmra.mxu0 %v149
    %v454 = vpop.f32.mrf.mxu0
    %v455 = vadd.f32 0.0, %v454
    %v456 = vpop.f32.mrf.mxu0
    %457 = vmatprep.mubr.f32.mxu0 0.0
    %458 = vmatmul.mubr.f32.gmra.mxu0 %v152
    %v459 = vpop.f32.mrf.mxu0
    %v460 = vadd.f32 0.0, %v459
    %v461 = vpop.f32.mrf.mxu0
    %462 = vmatprep.mubr.f32.mxu0 0.0
    %463 = vmatmul.mubr.f32.gmra.mxu0 %v155
    %v464 = vpop.f32.mrf.mxu0
    %v465 = vadd.f32 0.0, %v464
    %v466 = vpop.f32.mrf.mxu0
    %467 = vmatprep.mubr.f32.mxu0 0.0
    %468 = vmatmul.mubr.f32.gmra.mxu0 %v158
    %v469 = vpop.f32.mrf.mxu0
    %v470 = vadd.f32 0.0, %v469
    %v471 = vpop.f32.mrf.mxu0
    %472 = vmatprep.mubr.f32.mxu0 0.0
    %473 = vmatmul.mubr.f32.gmra.mxu0 %v161
    %v474 = vpop.f32.mrf.mxu0
    %v475 = vadd.f32 0.0, %v474
    %v476 = vpop.f32.mrf.mxu0
    %477 = vmatprep.mubr.f32.mxu0 0.0
    %478 = vmatmul.mubr.f32.gmra.mxu0 %v164
    %v479 = vpop.f32.mrf.mxu0
    %v480 = vadd.f32 0.0, %v479
    %v481 = vpop.f32.mrf.mxu0
    %482 = vmatprep.mubr.f32.mxu0 0.0
    %483 = vmatmul.mubr.f32.gmra.mxu0 %v167
    %v484 = vpop.f32.mrf.mxu0
    %v485 = vadd.f32 0.0, %v484
    %v486 = vpop.f32.mrf.mxu0
    %487 = vmatprep.mubr.f32.mxu0 0.0
    %488 = vmatmul.mubr.f32.gmra.mxu0 %v170
    %v489 = vpop.f32.mrf.mxu0
    %v490 = vadd.f32 0.0, %v489
    %v491 = vpop.f32.mrf.mxu0
    %492 = vmatprep.mubr.f32.mxu0 0.0
    %493 = vmatmul.mubr.f32.gmra.mxu0 %v173
    %v494 = vpop.f32.mrf.mxu0
    %v495 = vadd.f32 0.0, %v494
    %v496 = vpop.f32.mrf.mxu0
    %497 = vmatprep.mubr.f32.mxu0 0.0
    %498 = vmatmul.mubr.f32.gmra.mxu0 %v176
    %v499 = vpop.f32.mrf.mxu0
    %v500 = vadd.f32 0.0, %v499
    %v501 = vpop.f32.mrf.mxu0
    %502 = vmatprep.mubr.f32.mxu0 0.0
    %503 = vmatmul.mubr.f32.gmra.mxu0 %v179
    %v504 = vpop.f32.mrf.mxu0
    %v505 = vadd.f32 0.0, %v504
    %v506 = vpop.f32.mrf.mxu0
    %507 = vmatprep.mubr.f32.mxu0 0.0
    %508 = vmatmul.mubr.f32.gmra.mxu0 %v182
    %v509 = vpop.f32.mrf.mxu0
    %v510 = vadd.f32 0.0, %v509
    %v511 = vpop.f32.mrf.mxu0
    %512 = vmatprep.mubr.f32.mxu0 0.0
    %513 = vmatmul.mubr.f32.gmra.mxu0 %v185
    %v514 = vpop.f32.mrf.mxu0
    %v515 = vadd.f32 0.0, %v514
    %v516 = vpop.f32.mrf.mxu0
    %517 = vmatprep.mubr.f32.mxu0 0.0
    %518 = vmatmul.mubr.f32.gmra.mxu0 %v188
    %v519 = vpop.f32.mrf.mxu0
    %v520 = vadd.f32 0.0, %v519
    %v521 = vpop.f32.mrf.mxu0
    %522 = vmatprep.mubr.f32.mxu0 0.0
    %523 = vmatmul.mubr.f32.gmra.mxu0 %v191
    %v524 = vpop.f32.mrf.mxu0
    %v525 = vadd.f32 0.0, %v524
    %v526 = vpop.f32.mrf.mxu0
    %527 = vmatprep.mubr.f32.mxu0 0.0
    %528 = vmatmul.mubr.f32.gmra.mxu0 %v194
    %v529 = vpop.f32.mrf.mxu0
    %v530 = vadd.f32 0.0, %v529
    %v531 = vpop.f32.mrf.mxu0
    %532 = vmatprep.mubr.f32.mxu0 0.0
    %533 = vmatmul.mubr.f32.gmra.mxu0 %v197
    %v534 = vpop.f32.mrf.mxu0
    %v535 = vadd.f32 0.0, %v534
    %v536 = vpop.f32.mrf.mxu0
    %537 = vmatprep.mubr.f32.mxu0 0.0
    %538 = vmatmul.mubr.f32.gmra.mxu0 %v200
    %v539 = vpop.f32.mrf.mxu0
    %v540 = vadd.f32 0.0, %v539
    %v541 = vpop.f32.mrf.mxu0
    %542 = vmatprep.mubr.f32.mxu0 0.0
    %543 = vmatmul.mubr.f32.gmra.mxu0 %v203
    %v544 = vpop.f32.mrf.mxu0
    %v545 = vadd.f32 0.0, %v544
    %v546 = vpop.f32.mrf.mxu0
    %547 = vmatprep.mubr.f32.mxu0 0.0
    %548 = vmatmul.mubr.f32.gmra.mxu0 %v206
    %v549 = vpop.f32.mrf.mxu0
    %v550 = vadd.f32 0.0, %v549
    %v551 = vpop.f32.mrf.mxu0
    %552 = vmatprep.mubr.f32.mxu0 0.0
    %553 = vmatmul.mubr.f32.gmra.mxu0 %v209
    %v554 = vpop.f32.mrf.mxu0
    %v555 = vadd.f32 0.0, %v554
    %v556 = vpop.f32.mrf.mxu0
    %557 = vmatprep.mubr.f32.mxu0 0.0
    %558 = vmatmul.mubr.f32.gmra.mxu0 %v212
    %v559 = vpop.f32.mrf.mxu0
    %v560 = vadd.f32 0.0, %v559
    %v561 = vpop.f32.mrf.mxu0
    %562 = vmatprep.mubr.f32.mxu0 0.0
    %563 = vmatmul.mubr.f32.gmra.mxu0 %v215
    %v564 = vpop.f32.mrf.mxu0
    %v565 = vadd.f32 0.0, %v564
    %v566 = vpop.f32.mrf.mxu0
    %567 = vmatprep.mubr.f32.mxu0 0.0
    %568 = vmatmul.mubr.f32.gmra.mxu0 %v218
    %v569 = vpop.f32.mrf.mxu0
    %v570 = vadd.f32 0.0, %v569
    %v571 = vpop.f32.mrf.mxu0
    %572 = vmatprep.mubr.f32.mxu0 0.0
    %573 = vmatmul.mubr.f32.gmra.mxu0 %v221
    %v574 = vpop.f32.mrf.mxu0
    %v575 = vadd.f32 0.0, %v574
    %v576 = vpop.f32.mrf.mxu0
    %577 = vmatprep.mubr.f32.mxu0 0.0
    %578 = vmatmul.mubr.f32.gmra.mxu0 %v224
    %v579 = vpop.f32.mrf.mxu0
    %v580 = vadd.f32 0.0, %v579
    %v581 = vpop.f32.mrf.mxu0
    %582 = vmatprep.mubr.f32.mxu0 0.0
    %583 = vmatmul.mubr.f32.gmra.mxu0 %v227
    %v584 = vpop.f32.mrf.mxu0
    %v585 = vadd.f32 0.0, %v584
    %v586 = vpop.f32.mrf.mxu0
    %587 = vmatprep.mubr.f32.mxu0 0.0
    %588 = vmatmul.mubr.f32.gmra.mxu0 %v230
    %v589 = vpop.f32.mrf.mxu0
    %v590 = vadd.f32 0.0, %v589
    %v591 = vpop.f32.mrf.mxu0
    %592 = vmatprep.mubr.f32.mxu0 0.0
    %593 = vmatmul.mubr.f32.gmra.mxu0 %v233
    %v594 = vpop.f32.mrf.mxu0
    %v595 = vadd.f32 0.0, %v594
    %v596 = vpop.f32.mrf.mxu0
    %597 = vmatprep.mubr.f32.mxu0 0.0
    %598 = vmatmul.mubr.f32.gmra.mxu0 %v236
    %v599 = vpop.f32.mrf.mxu0
    %v600 = vadd.f32 0.0, %v599
    %v601 = vpop.f32.mrf.mxu0
    %602 = vmatprep.mubr.f32.mxu0 0.0
    %603 = vmatmul.mubr.f32.gmra.mxu0 %v239
    %v604 = vpop.f32.mrf.mxu0
    %v605 = vadd.f32 0.0, %v604
    %v606 = vpop.f32.mrf.mxu0
    %607 = vmatprep.mubr.f32.mxu0 0.0
    %608 = vmatmul.mubr.f32.gmra.mxu0 %v242
    %v609 = vpop.f32.mrf.mxu0
    %v610 = vadd.f32 0.0, %v609
    %v611 = vpop.f32.mrf.mxu0
    %612 = vmatprep.mubr.f32.mxu0 0.0
    %613 = vmatmul.mubr.f32.gmra.mxu0 %v245
    %v614 = vpop.f32.mrf.mxu0
    %v615 = vadd.f32 0.0, %v614
    %v616 = vpop.f32.mrf.mxu0
    %617 = vmatprep.mubr.f32.mxu0 0.0
    %618 = vmatmul.mubr.f32.gmra.mxu0 %v248
    %v619 = vpop.f32.mrf.mxu0
    %v620 = vadd.f32 0.0, %v619
    %v621 = vpop.f32.mrf.mxu0
    %622 = vmatprep.mubr.f32.mxu0 0.0
    %623 = vmatmul.mubr.f32.gmra.mxu0 %v251
    %v624 = vpop.f32.mrf.mxu0
    %v625 = vadd.f32 0.0, %v624
    %v626 = vpop.f32.mrf.mxu0
    %627 = vmatprep.mubr.f32.mxu0 0.0
    %628 = vmatmul.mubr.f32.gmra.mxu0 %v254
    %v629 = vpop.f32.mrf.mxu0
    %v630 = vadd.f32 0.0, %v629
    %v631 = vpop.f32.mrf.mxu0
    %632 = vmatprep.mubr.f32.mxu0 0.0
    %633 = vmatmul.mubr.f32.gmra.mxu0 %v257
    %v634 = vpop.f32.mrf.mxu0
    %v635 = vadd.f32 0.0, %v634
    %v636 = vpop.f32.mrf.mxu0
    %637 = vmatprep.mubr.f32.mxu0 0.0
    %638 = vmatmul.mubr.f32.gmra.mxu0 %v260
    %v639 = vpop.f32.mrf.mxu0
    %v640 = vadd.f32 0.0, %v639
    %v641 = vpop.f32.mrf.mxu0
    %642 = vmatprep.mubr.f32.mxu0 0.0
    %643 = vmatmul.mubr.f32.gmra.mxu0 %v263
    %v644 = vpop.f32.mrf.mxu0
    %v645 = vadd.f32 0.0, %v644
    %v646 = vpop.f32.mrf.mxu0
    %647 = vmatprep.mubr.f32.mxu0 0.0
    %648 = vmatmul.mubr.f32.gmra.mxu0 %v266
    %v649 = vpop.f32.mrf.mxu0
    %v650 = vadd.f32 0.0, %v649
    %v651 = vpop.f32.mrf.mxu0
    %652 = vmatprep.mubr.f32.mxu0 0.0
    %653 = vmatmul.mubr.f32.gmra.mxu0 %v269
    %v654 = vpop.f32.mrf.mxu0
    %v655 = vadd.f32 0.0, %v654
    %v656 = vpop.f32.mrf.mxu0
    %657 = vmatprep.mubr.f32.mxu0 0.0
    %658 = vmatmul.mubr.f32.gmra.mxu0 %v272
    %v659 = vpop.f32.mrf.mxu0
    %v660 = vadd.f32 0.0, %v659
    %v661 = vpop.f32.mrf.mxu0
    %662 = vdwg.mxu0
    %p663 = scmp.eq.s32.totalorder 0, 0
    // Predicated region
    $region10: #{tpu_custom_call.1} parent=1 // pred_check
      %p664 = pneg %p663
    $region11: #{tpu_custom_call.1} parent=1 // pred_check_branch
      %666 = sbr.rel (%p664) target = $region13
    $region12: #{tpu_custom_call.1} parent=1 // pred_region
      %vm667 = vcmask 24576
      %668 = vst.msk [vmem:[#allocation2] sm:$0x1] %vm667, 0.0
      %669 = vst.msk [vmem:[#allocation4] sm:$0x1] %vm667, 0.0
    $region13: #{tpu_custom_call.1} parent=1 // pred_fallthru
      _
    %670 = vst.msk [vmem:[%s2] sm:$0xff] %vm81, %v345
    %671 = vst.msk [vmem:[%s2 + $0x8] sm:$0xff] %vm81, %v350
    %672 = vst.msk [vmem:[%s2 + $0x10] sm:$0xff] %vm81, %v355
    %673 = vst.msk [vmem:[%s2 + $0x18] sm:$0xff] %vm81, %v360
    %674 = vst.msk [vmem:[%s2 + $0x20] sm:$0xff] %vm81, %v365
    %675 = vst.msk [vmem:[%s2 + $0x28] sm:$0xff] %vm81, %v370
    %676 = vst.msk [vmem:[%s2 + $0x30] sm:$0xff] %vm81, %v375
    %677 = vst.msk [vmem:[%s2 + $0x38] sm:$0xff] %vm81, %v380
    %678 = vst.msk [vmem:[%s2 + $0x40] sm:$0xff] %vm81, %v385
    %679 = vst.msk [vmem:[%s2 + $0x48] sm:$0xff] %vm81, %v390
    %680 = vst.msk [vmem:[%s2 + $0x50] sm:$0xff] %vm81, %v395
    %681 = vst.msk [vmem:[%s2 + $0x58] sm:$0xff] %vm81, %v400
    %682 = vst.msk [vmem:[%s2 + $0x60] sm:$0xff] %vm81, %v405
    %683 = vst.msk [vmem:[%s2 + $0x68] sm:$0xff] %vm81, %v410
    %684 = vst.msk [vmem:[%s2 + $0x70] sm:$0xff] %vm81, %v415
    %685 = vst.msk [vmem:[%s2 + $0x78] sm:$0xff] %vm81, %v420
    %686 = vst.msk [vmem:[%s2 + $0x80] sm:$0xff] %vm81, %v425
    %687 = vst.msk [vmem:[%s2 + $0x88] sm:$0xff] %vm81, %v430
    %688 = vst.msk [vmem:[%s2 + $0x90] sm:$0xff] %vm81, %v435
    %689 = vst.msk [vmem:[%s2 + $0x98] sm:$0xff] %vm81, %v440
    %690 = vst.msk [vmem:[%s2 + $0xa0] sm:$0xff] %vm81, %v445
    %691 = vst.msk [vmem:[%s2 + $0xa8] sm:$0xff] %vm81, %v450
    %692 = vst.msk [vmem:[%s2 + $0xb0] sm:$0xff] %vm81, %v455
    %693 = vst.msk [vmem:[%s2 + $0xb8] sm:$0xff] %vm81, %v460
    %694 = vst.msk [vmem:[%s2 + $0xc0] sm:$0xff] %vm81, %v465
    %695 = vst.msk [vmem:[%s2 + $0xc8] sm:$0xff] %vm81, %v470
    %696 = vst.msk [vmem:[%s2 + $0xd0] sm:$0xff] %vm81, %v475
    %697 = vst.msk [vmem:[%s2 + $0xd8] sm:$0xff] %vm81, %v480
    %698 = vst.msk [vmem:[%s2 + $0xe0] sm:$0xff] %vm81, %v485
    %699 = vst.msk [vmem:[%s2 + $0xe8] sm:$0xff] %vm81, %v490
    %700 = vst.msk [vmem:[%s2 + $0xf0] sm:$0xff] %vm81, %v495
    %701 = vst.msk [vmem:[%s2 + $0xf8] sm:$0xff] %vm81, %v500
    %702 = vst.msk [vmem:[%s2 + $0x100] sm:$0xff] %vm81, %v505
    %703 = vst.msk [vmem:[%s2 + $0x108] sm:$0xff] %vm81, %v510
    %704 = vst.msk [vmem:[%s2 + $0x110] sm:$0xff] %vm81, %v515
    %705 = vst.msk [vmem:[%s2 + $0x118] sm:$0xff] %vm81, %v520
    %706 = vst.msk [vmem:[%s2 + $0x120] sm:$0xff] %vm81, %v525
    %707 = vst.msk [vmem:[%s2 + $0x128] sm:$0xff] %vm81, %v530
    %708 = vst.msk [vmem:[%s2 + $0x130] sm:$0xff] %vm81, %v535
    %709 = vst.msk [vmem:[%s2 + $0x138] sm:$0xff] %vm81, %v540
    %710 = vst.msk [vmem:[%s2 + $0x140] sm:$0xff] %vm81, %v545
    %711 = vst.msk [vmem:[%s2 + $0x148] sm:$0xff] %vm81, %v550
    %712 = vst.msk [vmem:[%s2 + $0x150] sm:$0xff] %vm81, %v555
    %713 = vst.msk [vmem:[%s2 + $0x158] sm:$0xff] %vm81, %v560
    %714 = vst.msk [vmem:[%s2 + $0x160] sm:$0xff] %vm81, %v565
    %715 = vst.msk [vmem:[%s2 + $0x168] sm:$0xff] %vm81, %v570
    %716 = vst.msk [vmem:[%s2 + $0x170] sm:$0xff] %vm81, %v575
    %717 = vst.msk [vmem:[%s2 + $0x178] sm:$0xff] %vm81, %v580
    %718 = vst.msk [vmem:[%s2 + $0x180] sm:$0xff] %vm81, %v585
    %719 = vst.msk [vmem:[%s2 + $0x188] sm:$0xff] %vm81, %v590
    %720 = vst.msk [vmem:[%s2 + $0x190] sm:$0xff] %vm81, %v595
    %721 = vst.msk [vmem:[%s2 + $0x198] sm:$0xff] %vm81, %v600
    %722 = vst.msk [vmem:[%s2 + $0x1a0] sm:$0xff] %vm81, %v605
    %723 = vst.msk [vmem:[%s2 + $0x1a8] sm:$0xff] %vm81, %v610
    %724 = vst.msk [vmem:[%s2 + $0x1b0] sm:$0xff] %vm81, %v615
    %725 = vst.msk [vmem:[%s2 + $0x1b8] sm:$0xff] %vm81, %v620
    %726 = vst.msk [vmem:[%s2 + $0x1c0] sm:$0xff] %vm81, %v625
    %727 = vst.msk [vmem:[%s2 + $0x1c8] sm:$0xff] %vm81, %v630
    %728 = vst.msk [vmem:[%s2 + $0x1d0] sm:$0xff] %vm81, %v635
    %729 = vst.msk [vmem:[%s2 + $0x1d8] sm:$0xff] %vm81, %v640
    %730 = vst.msk [vmem:[%s2 + $0x1e0] sm:$0xff] %vm81, %v645
    %731 = vst.msk [vmem:[%s2 + $0x1e8] sm:$0xff] %vm81, %v650
    %732 = vst.msk [vmem:[%s2 + $0x1f0] sm:$0xff] %vm81, %v655
    %733 = vst.msk [vmem:[%s2 + $0x1f8] sm:$0xff] %vm81, %v660
    %v734 = vld [vmem:[#allocation2] sm:$0x1]
    %v735 = vsel %vm81, %v345, 0.0
    %v736 = vsel %vm81, %v350, 0.0
    %v737 = vadd.f32 %v735, %v736
    %v738 = vsel %vm81, %v355, 0.0
    %v739 = vadd.f32 %v737, %v738
    %v740 = vsel %vm81, %v360, 0.0
    %v741 = vadd.f32 %v739, %v740
    %v742 = vsel %vm81, %v365, 0.0
    %v743 = vadd.f32 %v741, %v742
    %v744 = vsel %vm81, %v370, 0.0
    %v745 = vadd.f32 %v743, %v744
    %v746 = vsel %vm81, %v375, 0.0
    %v747 = vadd.f32 %v745, %v746
    %v748 = vsel %vm81, %v380, 0.0
    %v749 = vadd.f32 %v747, %v748
    %v750 = vsel %vm81, %v385, 0.0
    %v751 = vadd.f32 %v749, %v750
    %v752 = vsel %vm81, %v390, 0.0
    %v753 = vadd.f32 %v751, %v752
    %v754 = vsel %vm81, %v395, 0.0
    %v755 = vadd.f32 %v753, %v754
    %v756 = vsel %vm81, %v400, 0.0
    %v757 = vadd.f32 %v755, %v756
    %v758 = vsel %vm81, %v405, 0.0
    %v759 = vadd.f32 %v757, %v758
    %v760 = vsel %vm81, %v410, 0.0
    %v761 = vadd.f32 %v759, %v760
    %v762 = vsel %vm81, %v415, 0.0
    %v763 = vadd.f32 %v761, %v762
    %v764 = vsel %vm81, %v420, 0.0
    %v765 = vadd.f32 %v763, %v764
    %v766 = vsel %vm81, %v425, 0.0
    %v767 = vadd.f32 %v765, %v766
    %v768 = vsel %vm81, %v430, 0.0
    %v769 = vadd.f32 %v767, %v768
    %v770 = vsel %vm81, %v435, 0.0
    %v771 = vadd.f32 %v769, %v770
    %v772 = vsel %vm81, %v440, 0.0
    %v773 = vadd.f32 %v771, %v772
    %v774 = vsel %vm81, %v445, 0.0
    %v775 = vadd.f32 %v773, %v774
    %v776 = vsel %vm81, %v450, 0.0
    %v777 = vadd.f32 %v775, %v776
    %v778 = vsel %vm81, %v455, 0.0
    %v779 = vadd.f32 %v777, %v778
    %v780 = vsel %vm81, %v460, 0.0
    %v781 = vadd.f32 %v779, %v780
    %v782 = vsel %vm81, %v465, 0.0
    %v783 = vadd.f32 %v781, %v782
    %v784 = vsel %vm81, %v470, 0.0
    %v785 = vadd.f32 %v783, %v784
    %v786 = vsel %vm81, %v475, 0.0
    %v787 = vadd.f32 %v785, %v786
    %v788 = vsel %vm81, %v480, 0.0
    %v789 = vadd.f32 %v787, %v788
    %v790 = vsel %vm81, %v485, 0.0
    %v791 = vadd.f32 %v789, %v790
    %v792 = vsel %vm81, %v490, 0.0
    %v793 = vadd.f32 %v791, %v792
    %v794 = vsel %vm81, %v495, 0.0
    %v795 = vadd.f32 %v793, %v794
    %v796 = vsel %vm81, %v500, 0.0
    %v797 = vadd.f32 %v795, %v796
    %v798 = vsel %vm81, %v505, 0.0
    %v799 = vadd.f32 %v797, %v798
    %v800 = vsel %vm81, %v510, 0.0
    %v801 = vadd.f32 %v799, %v800
    %v802 = vsel %vm81, %v515, 0.0
    %v803 = vadd.f32 %v801, %v802
    %v804 = vsel %vm81, %v520, 0.0
    %v805 = vadd.f32 %v803, %v804
    %v806 = vsel %vm81, %v525, 0.0
    %v807 = vadd.f32 %v805, %v806
    %v808 = vsel %vm81, %v530, 0.0
    %v809 = vadd.f32 %v807, %v808
    %v810 = vsel %vm81, %v535, 0.0
    %v811 = vadd.f32 %v809, %v810
    %v812 = vsel %vm81, %v540, 0.0
    %v813 = vadd.f32 %v811, %v812
    %v814 = vsel %vm81, %v545, 0.0
    %v815 = vadd.f32 %v813, %v814
    %v816 = vsel %vm81, %v550, 0.0
    %v817 = vadd.f32 %v815, %v816
    %v818 = vsel %vm81, %v555, 0.0
    %v819 = vadd.f32 %v817, %v818
    %v820 = vsel %vm81, %v560, 0.0
    %v821 = vadd.f32 %v819, %v820
    %v822 = vsel %vm81, %v565, 0.0
    %v823 = vadd.f32 %v821, %v822
    %v824 = vsel %vm81, %v570, 0.0
    %v825 = vadd.f32 %v823, %v824
    %v826 = vsel %vm81, %v575, 0.0
    %v827 = vadd.f32 %v825, %v826
    %v828 = vsel %vm81, %v580, 0.0
    %v829 = vadd.f32 %v827, %v828
    %v830 = vsel %vm81, %v585, 0.0
    %v831 = vadd.f32 %v829, %v830
    %v832 = vsel %vm81, %v590, 0.0
    %v833 = vadd.f32 %v831, %v832
    %v834 = vsel %vm81, %v595, 0.0
    %v835 = vadd.f32 %v833, %v834
    %v836 = vsel %vm81, %v600, 0.0
    %v837 = vadd.f32 %v835, %v836
    %v838 = vsel %vm81, %v605, 0.0
    %v839 = vadd.f32 %v837, %v838
    %v840 = vsel %vm81, %v610, 0.0
    %v841 = vadd.f32 %v839, %v840
    %v842 = vsel %vm81, %v615, 0.0
    %v843 = vadd.f32 %v841, %v842
    %v844 = vsel %vm81, %v620, 0.0
    %v845 = vadd.f32 %v843, %v844
    %v846 = vsel %vm81, %v625, 0.0
    %v847 = vadd.f32 %v845, %v846
    %v848 = vsel %vm81, %v630, 0.0
    %v849 = vadd.f32 %v847, %v848
    %v850 = vsel %vm81, %v635, 0.0
    %v851 = vadd.f32 %v849, %v850
    %v852 = vsel %vm81, %v640, 0.0
    %v853 = vadd.f32 %v851, %v852
    %v854 = vsel %vm81, %v645, 0.0
    %v855 = vadd.f32 %v853, %v854
    %v856 = vsel %vm81, %v650, 0.0
    %v857 = vadd.f32 %v855, %v856
    %v858 = vsel %vm81, %v655, 0.0
    %v859 = vadd.f32 %v857, %v858
    %v860 = vsel %vm81, %v660, 0.0
    %v861 = vadd.f32 %v859, %v860
    %v862 = vrot.slane %v861, 4
    %v863 = vadd.f32 %v861, %v862
    %v864 = vrot.slane %v863, 2
    %v865 = vadd.f32 %v863, %v864
    %v866 = vrot.slane %v865, 1
    %v867 = vadd.f32 %v865, %v866
    %v868 = vadd.f32 %v734, %v867
    %vm869 = vcmask 24576
    %870 = vst.msk [vmem:[#allocation2] sm:$0x1] %vm869, %v868
    %v871 = vld [vmem:[#allocation4] sm:$0x1]
    %v872 = vmul.f32 %v345, %v345
    %v873 = vmul.f32 %v350, %v350
    %v874 = vmul.f32 %v355, %v355
    %v875 = vmul.f32 %v360, %v360
    %v876 = vmul.f32 %v365, %v365
    %v877 = vmul.f32 %v370, %v370
    %v878 = vmul.f32 %v375, %v375
    %v879 = vmul.f32 %v380, %v380
    %v880 = vmul.f32 %v385, %v385
    %v881 = vmul.f32 %v390, %v390
    %v882 = vmul.f32 %v395, %v395
    %v883 = vmul.f32 %v400, %v400
    %v884 = vmul.f32 %v405, %v405
    %v885 = vmul.f32 %v410, %v410
    %v886 = vmul.f32 %v415, %v415
    %v887 = vmul.f32 %v420, %v420
    %v888 = vmul.f32 %v425, %v425
    %v889 = vmul.f32 %v430, %v430
    %v890 = vmul.f32 %v435, %v435
    %v891 = vmul.f32 %v440, %v440
    %v892 = vmul.f32 %v445, %v445
    %v893 = vmul.f32 %v450, %v450
    %v894 = vmul.f32 %v455, %v455
    %v895 = vmul.f32 %v460, %v460
    %v896 = vmul.f32 %v465, %v465
    %v897 = vmul.f32 %v470, %v470
    %v898 = vmul.f32 %v475, %v475
    %v899 = vmul.f32 %v480, %v480
    %v900 = vmul.f32 %v485, %v485
    %v901 = vmul.f32 %v490, %v490
    %v902 = vmul.f32 %v495, %v495
    %v903 = vmul.f32 %v500, %v500
    %v904 = vmul.f32 %v505, %v505
    %v905 = vmul.f32 %v510, %v510
    %v906 = vmul.f32 %v515, %v515
    %v907 = vmul.f32 %v520, %v520
    %v908 = vmul.f32 %v525, %v525
    %v909 = vmul.f32 %v530, %v530
    %v910 = vmul.f32 %v535, %v535
    %v911 = vmul.f32 %v540, %v540
    %v912 = vmul.f32 %v545, %v545
    %v913 = vmul.f32 %v550, %v550
    %v914 = vmul.f32 %v555, %v555
    %v915 = vmul.f32 %v560, %v560
    %v916 = vmul.f32 %v565, %v565
    %v917 = vmul.f32 %v570, %v570
    %v918 = vmul.f32 %v575, %v575
    %v919 = vmul.f32 %v580, %v580
    %v920 = vmul.f32 %v585, %v585
    %v921 = vmul.f32 %v590, %v590
    %v922 = vmul.f32 %v595, %v595
    %v923 = vmul.f32 %v600, %v600
    %v924 = vmul.f32 %v605, %v605
    %v925 = vmul.f32 %v610, %v610
    %v926 = vmul.f32 %v615, %v615
    %v927 = vmul.f32 %v620, %v620
    %v928 = vmul.f32 %v625, %v625
    %v929 = vmul.f32 %v630, %v630
    %v930 = vmul.f32 %v635, %v635
    %v931 = vmul.f32 %v640, %v640
    %v932 = vmul.f32 %v645, %v645
    %v933 = vmul.f32 %v650, %v650
    %v934 = vmul.f32 %v655, %v655
    %v935 = vmul.f32 %v660, %v660
    %v936 = vsel %vm81, %v872, 0.0
    %v937 = vsel %vm81, %v873, 0.0
    %v938 = vadd.f32 %v936, %v937
    %v939 = vsel %vm81, %v874, 0.0
    %v940 = vadd.f32 %v938, %v939
    %v941 = vsel %vm81, %v875, 0.0
    %v942 = vadd.f32 %v940, %v941
    %v943 = vsel %vm81, %v876, 0.0
    %v944 = vadd.f32 %v942, %v943
    %v945 = vsel %vm81, %v877, 0.0
    %v946 = vadd.f32 %v944, %v945
    %v947 = vsel %vm81, %v878, 0.0
    %v948 = vadd.f32 %v946, %v947
    %v949 = vsel %vm81, %v879, 0.0
    %v950 = vadd.f32 %v948, %v949
    %v951 = vsel %vm81, %v880, 0.0
    %v952 = vadd.f32 %v950, %v951
    %v953 = vsel %vm81, %v881, 0.0
    %v954 = vadd.f32 %v952, %v953
    %v955 = vsel %vm81, %v882, 0.0
    %v956 = vadd.f32 %v954, %v955
    %v957 = vsel %vm81, %v883, 0.0
    %v958 = vadd.f32 %v956, %v957
    %v959 = vsel %vm81, %v884, 0.0
    %v960 = vadd.f32 %v958, %v959
    %v961 = vsel %vm81, %v885, 0.0
    %v962 = vadd.f32 %v960, %v961
    %v963 = vsel %vm81, %v886, 0.0
    %v964 = vadd.f32 %v962, %v963
    %v965 = vsel %vm81, %v887, 0.0
    %v966 = vadd.f32 %v964, %v965
    %v967 = vsel %vm81, %v888, 0.0
    %v968 = vadd.f32 %v966, %v967
    %v969 = vsel %vm81, %v889, 0.0
    %v970 = vadd.f32 %v968, %v969
    %v971 = vsel %vm81, %v890, 0.0
    %v972 = vadd.f32 %v970, %v971
    %v973 = vsel %vm81, %v891, 0.0
    %v974 = vadd.f32 %v972, %v973
    %v975 = vsel %vm81, %v892, 0.0
    %v976 = vadd.f32 %v974, %v975
    %v977 = vsel %vm81, %v893, 0.0
    %v978 = vadd.f32 %v976, %v977
    %v979 = vsel %vm81, %v894, 0.0
    %v980 = vadd.f32 %v978, %v979
    %v981 = vsel %vm81, %v895, 0.0
    %v982 = vadd.f32 %v980, %v981
    %v983 = vsel %vm81, %v896, 0.0
    %v984 = vadd.f32 %v982, %v983
    %v985 = vsel %vm81, %v897, 0.0
    %v986 = vadd.f32 %v984, %v985
    %v987 = vsel %vm81, %v898, 0.0
    %v988 = vadd.f32 %v986, %v987
    %v989 = vsel %vm81, %v899, 0.0
    %v990 = vadd.f32 %v988, %v989
    %v991 = vsel %vm81, %v900, 0.0
    %v992 = vadd.f32 %v990, %v991
    %v993 = vsel %vm81, %v901, 0.0
    %v994 = vadd.f32 %v992, %v993
    %v995 = vsel %vm81, %v902, 0.0
    %v996 = vadd.f32 %v994, %v995
    %v997 = vsel %vm81, %v903, 0.0
    %v998 = vadd.f32 %v996, %v997
    %v999 = vsel %vm81, %v904, 0.0
    %v1000 = vadd.f32 %v998, %v999
    %v1001 = vsel %vm81, %v905, 0.0
    %v1002 = vadd.f32 %v1000, %v1001
    %v1003 = vsel %vm81, %v906, 0.0
    %v1004 = vadd.f32 %v1002, %v1003
    %v1005 = vsel %vm81, %v907, 0.0
    %v1006 = vadd.f32 %v1004, %v1005
    %v1007 = vsel %vm81, %v908, 0.0
    %v1008 = vadd.f32 %v1006, %v1007
    %v1009 = vsel %vm81, %v909, 0.0
    %v1010 = vadd.f32 %v1008, %v1009
    %v1011 = vsel %vm81, %v910, 0.0
    %v1012 = vadd.f32 %v1010, %v1011
    %v1013 = vsel %vm81, %v911, 0.0
    %v1014 = vadd.f32 %v1012, %v1013
    %v1015 = vsel %vm81, %v912, 0.0
    %v1016 = vadd.f32 %v1014, %v1015
    %v1017 = vsel %vm81, %v913, 0.0
    %v1018 = vadd.f32 %v1016, %v1017
    %v1019 = vsel %vm81, %v914, 0.0
    %v1020 = vadd.f32 %v1018, %v1019
    %v1021 = vsel %vm81, %v915, 0.0
    %v1022 = vadd.f32 %v1020, %v1021
    %v1023 = vsel %vm81, %v916, 0.0
    %v1024 = vadd.f32 %v1022, %v1023
    %v1025 = vsel %vm81, %v917, 0.0
    %v1026 = vadd.f32 %v1024, %v1025
    %v1027 = vsel %vm81, %v918, 0.0
    %v1028 = vadd.f32 %v1026, %v1027
    %v1029 = vsel %vm81, %v919, 0.0
    %v1030 = vadd.f32 %v1028, %v1029
    %v1031 = vsel %vm81, %v920, 0.0
    %v1032 = vadd.f32 %v1030, %v1031
    %v1033 = vsel %vm81, %v921, 0.0
    %v1034 = vadd.f32 %v1032, %v1033
    %v1035 = vsel %vm81, %v922, 0.0
    %v1036 = vadd.f32 %v1034, %v1035
    %v1037 = vsel %vm81, %v923, 0.0
    %v1038 = vadd.f32 %v1036, %v1037
    %v1039 = vsel %vm81, %v924, 0.0
    %v1040 = vadd.f32 %v1038, %v1039
    %v1041 = vsel %vm81, %v925, 0.0
    %v1042 = vadd.f32 %v1040, %v1041
    %v1043 = vsel %vm81, %v926, 0.0
    %v1044 = vadd.f32 %v1042, %v1043
    %v1045 = vsel %vm81, %v927, 0.0
    %v1046 = vadd.f32 %v1044, %v1045
    %v1047 = vsel %vm81, %v928, 0.0
    %v1048 = vadd.f32 %v1046, %v1047
    %v1049 = vsel %vm81, %v929, 0.0
    %v1050 = vadd.f32 %v1048, %v1049
    %v1051 = vsel %vm81, %v930, 0.0
    %v1052 = vadd.f32 %v1050, %v1051
    %v1053 = vsel %vm81, %v931, 0.0
    %v1054 = vadd.f32 %v1052, %v1053
    %v1055 = vsel %vm81, %v932, 0.0
    %v1056 = vadd.f32 %v1054, %v1055
    %v1057 = vsel %vm81, %v933, 0.0
    %v1058 = vadd.f32 %v1056, %v1057
    %v1059 = vsel %vm81, %v934, 0.0
    %v1060 = vadd.f32 %v1058, %v1059
    %v1061 = vsel %vm81, %v935, 0.0
    %v1062 = vadd.f32 %v1060, %v1061
    %v1063 = vrot.slane %v1062, 4
    %v1064 = vadd.f32 %v1062, %v1063
    %v1065 = vrot.slane %v1064, 2
    %v1066 = vadd.f32 %v1064, %v1065
    %v1067 = vrot.slane %v1066, 1
    %v1068 = vadd.f32 %v1066, %v1067
    %v1069 = vadd.f32 %v871, %v1068
    %1070 = vst.msk [vmem:[#allocation4] sm:$0x1] %vm869, %v1069
    // Predicated region
    $region14: #{tpu_custom_call.1} parent=1 // pred_check
      _
    $region15: #{tpu_custom_call.1} parent=1 // pred_check_branch
      %1072 = sbr.rel (0) target = $region17
    $region16: #{tpu_custom_call.1} parent=1 // pred_region
      _
    $region17: #{tpu_custom_call.1} parent=1 // pred_fallthru
      _
    // Predicated region
    $region18: #{tpu_custom_call.1} parent=1 // pred_check
      _
    $region19: #{tpu_custom_call.1} parent=1 // pred_check_branch
      %1074 = sbr.rel (0) target = $region21
    $region20: #{tpu_custom_call.1} parent=1 // pred_region
      %s1076 = ssub.s32 16, 16
      %1077 = vsyncadd [#allocation3], %s1076
      %s1079 = sshll.u32 [#allocation2], 4
      %s1080 = int_to_ptr.vmem [resolvable:$true] %s1079
      %1082 = dma.vmem_to_hbm [thread:$0]  %s1080, 16, %s3, [#allocation3]
    $region21: #{tpu_custom_call.1} parent=1 // pred_fallthru
      _
    // Predicated region
    $region22: #{tpu_custom_call.1} parent=1 // pred_check
      _
    $region23: #{tpu_custom_call.1} parent=1 // pred_check_branch
      %1084 = sbr.rel (0) target = $region25
    $region24: #{tpu_custom_call.1} parent=1 // pred_region
      %s1086 = ssub.s32 16, 16
      %1087 = vsyncadd [#allocation5], %s1086
      %s1089 = sshll.u32 [#allocation4], 4
      %s1090 = int_to_ptr.vmem [resolvable:$true] %s1089
      %1092 = dma.vmem_to_hbm [thread:$0]  %s1090, 16, %s4, [#allocation5]
    $region25: #{tpu_custom_call.1} parent=1 // pred_fallthru
      _
    // Predicated region
    $region26: #{tpu_custom_call.1} parent=1 // pred_check
      _
    $region27: #{tpu_custom_call.1} parent=1 // pred_check_branch
      %1094 = sbr.rel (0) target = $region29
    $region28: #{tpu_custom_call.1} parent=1 // pred_region
      _
    $region29: #{tpu_custom_call.1} parent=1 // pred_fallthru
      _
    // Predicated region
    $region30: #{tpu_custom_call.1} parent=1 // pred_check
      _
    $region31: #{tpu_custom_call.1} parent=1 // pred_check_branch
      %1096 = sbr.rel (0) target = $region33
    $region32: #{tpu_custom_call.1} parent=1 // pred_region
      %1097 = dma.done [#allocation3], 16
    $region33: #{tpu_custom_call.1} parent=1 // pred_fallthru
      _
    // Predicated region
    $region34: #{tpu_custom_call.1} parent=1 // pred_check
      _
    $region35: #{tpu_custom_call.1} parent=1 // pred_check_branch
      %1099 = sbr.rel (0) target = $region37
    $region36: #{tpu_custom_call.1} parent=1 // pred_region
      %1100 = dma.done [#allocation5], 16
    $region37: #{tpu_custom_call.1} parent=1 // pred_fallthru
      _
    %1101 = vsyncpa [#allocation3], 1
    %1102 = vsyncpa [#allocation5], 1

</llo_original>
